<compile_context>
chip_gen: v7x
topology: tpu7x:2x2x1
jax: 0.10.0
libtpu: 0.0.40
codegen_flags: <defaults>
</compile_context>

<pallas_src>
import functools

import jax
import jax.numpy as jnp
from jax import lax
from jax.experimental import pallas as pl
from jax.experimental.pallas import tpu as pltpu


def _res2_kernel(x_ref, w_ref, b_ref, g_ref, bt_ref, o_ref, sp_ref, *,
                 scale, kernel_size, padding, dilation, eps):
    """One grid step == one Res2 branch (channel chunk), NCT layout.

    x_ref  : (B, width, T)           input chunk for this branch (lane axis = T)
    w_ref  : (nums, K, width, width) bf16 conv weights, W[i, k, out, in]
    b_ref, g_ref, bt_ref : (nums, width, 1) f32 conv-bias / BN-gamma / BN-beta
    o_ref  : (B, width, T)           output chunk
    sp_ref : (B, width, T) f32       carry (previous branch's BN output)
    """
    i = pl.program_id(0)
    nums = scale if scale == 1 else scale - 1
    B, width, T = x_ref.shape
    inv_n = 1.0 / float(B * T)

    @pl.when(i == 0)
    def _init():
        sp_ref[...] = jnp.zeros(sp_ref.shape, jnp.float32)

    def branch():
        # Residual carry: sp = spx[0] (i==0) else bn_out[i-1] + spx[i].
        u = sp_ref[...] + x_ref[...].astype(jnp.float32)          # (B, width, T) f32
        ub = u.astype(jnp.bfloat16)                                # single cast pass

        # ---- Conv1d: K per-tap batched matmuls, lane axis (N dim) = T ----
        w_i = w_ref[i]                                             # (K, width, width) bf16
        acc = None
        for k in range(kernel_size):
            s = k * dilation - padding                             # static shift along T
            if s == 0:
                tap = ub
            elif s > 0:
                tap = jnp.concatenate(
                    [ub[:, :, s:], jnp.zeros((B, width, s), jnp.bfloat16)], axis=-1)
            else:
                tap = jnp.concatenate(
                    [jnp.zeros((B, width, -s), jnp.bfloat16), ub[:, :, :T + s]],
                    axis=-1)
            w_k = jnp.broadcast_to(w_i[k][None], (B, width, width))
            d = lax.dot_general(w_k, tap,
                                dimension_numbers=(((2,), (1,)), ((0,), (0,))),
                                preferred_element_type=jnp.float32)  # (B, width, T)
            acc = d if acc is None else acc + d

        bias = b_ref[pl.ds(i, 1), :, :]                            # (1, width, 1)
        r = jnp.maximum(acc + bias, 0.0)                           # fused bias + ReLU

        # ---- BatchNorm1d (train mode): two-pass centered stats, biased variance ----
        s0 = jnp.sum(r, axis=0, keepdims=True)                     # (1, width, T)
        mean = jnp.sum(s0, axis=2, keepdims=True) * inv_n          # (1, width, 1)
        c = r - mean
        c0 = jnp.sum(c * c, axis=0, keepdims=True)
        var = jnp.sum(c0, axis=2, keepdims=True) * inv_n
        gamma = g_ref[pl.ds(i, 1), :, :]
        beta = bt_ref[pl.ds(i, 1), :, :]
        out = c * (lax.rsqrt(var + eps) * gamma) + beta            # single affine pass

        sp_ref[...] = out                                          # carry to next branch
        o_ref[...] = out.astype(o_ref.dtype)

    def passthrough():
        # last chunk passes through untouched (scale != 1); keeps w_ref[i] guarded.
        o_ref[...] = x_ref[...]

    if scale == 1:
        branch()
    else:
        pl.when(i < nums)(branch)
        pl.when(i == nums)(passthrough)


def _res2_core(x_nct, w_bf16, conv_b, bn_gamma, bn_beta, *,
               kernel_size, padding, dilation, scale, eps):
    """Core Pallas call: indexes the NCT tensor directly (no boundary transposes)."""
    B, C, T = x_nct.shape
    width = C // scale
    nums = scale if scale == 1 else scale - 1

    kernel = functools.partial(_res2_kernel, scale=scale, kernel_size=kernel_size,
                               padding=padding, dilation=dilation, eps=eps)

    # VMEM budget: double-buffered in/out chunks + f32 carry + in-kernel temporaries.
    chunk_f32 = B * width * T * 4
    est = chunk_f32 * (2 + 2 + 1 + 6) + 2 * (w_bf16.size * 2 + 3 * nums * width * 4)
    try:
        cap = int(getattr(pltpu.get_tpu_info(), "vmem_capacity_bytes",
                          64 * 1024 * 1024))
    except Exception:
        cap = 64 * 1024 * 1024
    vmem_limit = max(32 * 1024 * 1024, min(int(1.25 * est), (3 * cap) // 4))

    flops = 2 * nums * B * T * kernel_size * width * width
    bytes_accessed = 2 * B * C * T * 4 + w_bf16.size * 2 + 3 * nums * width * 4
    cost = pl.CostEstimate(flops=flops, transcendentals=nums * width,
                           bytes_accessed=bytes_accessed)

    chunk_spec = pl.BlockSpec((B, width, T), lambda i: (0, i, 0))
    full = lambda a: pl.BlockSpec(a.shape, lambda i, nd=a.ndim: (0,) * nd)

    return pl.pallas_call(
        kernel,
        out_shape=jax.ShapeDtypeStruct((B, C, T), x_nct.dtype),
        grid=(scale,),
        in_specs=[chunk_spec, full(w_bf16), full(conv_b), full(bn_gamma),
                  full(bn_beta)],
        out_specs=chunk_spec,
        scratch_shapes=[pltpu.VMEM((B, width, T), jnp.float32)],   # branch carry
        compiler_params=pltpu.CompilerParams(
            dimension_semantics=("arbitrary",),     # branches are sequentially dependent
            vmem_limit_bytes=vmem_limit),
        cost_estimate=cost,
    )(x_nct, w_bf16, conv_b, bn_gamma, bn_beta)


def res2conv1d_relu_bn(x_nct, conv_w, conv_b, bn_gamma, bn_beta, *,
                       kernel_size=1, stride=1, padding=0, dilation=1,
                       scale=4, eps=1e-5):
    """PyTorch-layout entry. x_nct: (B, C, T) f32. conv_w: (nums, out, in, K)
    (PyTorch layout); conv_b / bn_gamma / bn_beta: (nums, width). Returns (B, C, T)."""
    assert stride == 1, "only stride=1 supported"
    B, C, T = x_nct.shape
    assert C % scale == 0
    width = C // scale
    nums = scale if scale == 1 else scale - 1
    # residual chain + channel concat require the conv to preserve length
    assert T + 2 * padding - dilation * (kernel_size - 1) == T
    # per-branch chunk is the second-to-last block dim -> must respect sublane tiling
    assert width % 8 == 0 or width == C, \
        "width must be a multiple of 8 (true for real ECAPA configs)"

    # (nums, out, in, K) -> (nums, K, out, in); bf16 operands for the MXU.
    w_bf16 = jnp.transpose(conv_w, (0, 3, 1, 2)).astype(jnp.bfloat16)
    # per-channel params shaped (nums, width, 1) so they broadcast along T in-kernel.
    p = lambda a: a.astype(jnp.float32).reshape(nums, width, 1)

    return _res2_core(x_nct, w_bf16, p(conv_b), p(bn_gamma), p(bn_beta),
                      kernel_size=kernel_size, padding=padding,
                      dilation=dilation, scale=scale, eps=eps)


def res2_reference(x, W, bconv, gamma, beta, *, kernel_size, padding, dilation,
                   scale, eps=1e-5):
    """Plain-JAX reference matching the PyTorch forward (NCT layout). Conv operands
    are cast to bf16 (f32 accumulate) to mirror the kernel's MXU-native precision."""
    B, C, T = x.shape
    width = C // scale
    nums = scale if scale == 1 else scale - 1
    spx = [x[:, i * width:(i + 1) * width, :] for i in range(scale)]
    Wb = W.astype(jnp.bfloat16)
    outs = []
    sp = None
    for i in range(nums):
        sp = spx[i] if i == 0 else sp + spx[i]
        sp_pad = jnp.pad(sp, ((0, 0), (0, 0), (padding, padding)))
        y = jnp.zeros((B, width, T), jnp.float32) + bconv[i][None, :, None]
        for k in range(kernel_size):
            xk = lax.slice(sp_pad, (0, 0, k * dilation),
                           (B, width, k * dilation + T))
            y = y + jnp.einsum('oc,bct->bot', Wb[i, :, :, k],
                               xk.astype(jnp.bfloat16),
                               preferred_element_type=jnp.float32)
        r = jnp.maximum(y, 0.0)
        mean = jnp.mean(r, axis=(0, 2), keepdims=True)
        var = jnp.mean(jnp.square(r - mean), axis=(0, 2), keepdims=True)
        sp = (r - mean) * lax.rsqrt(var + eps) * gamma[i][None, :, None] \
             + beta[i][None, :, None]
        outs.append(sp)
    if scale != 1:
        outs.append(spx[nums])
    return jnp.concatenate(outs, axis=1)


def _run_case(key, B, channels, T, scale, K, padding, dilation):
    width = channels // scale
    nums = scale if scale == 1 else scale - 1
    k0, k1, k2, k3, k4 = jax.random.split(key, 5)
    x = jax.random.normal(k0, (B, channels, T), jnp.float32)
    conv_w = 0.3 * jax.random.normal(k1, (nums, width, width, K), jnp.float32)
    conv_b = 0.1 * jax.random.normal(k2, (nums, width), jnp.float32)
    bn_gamma = 1.0 + 0.1 * jax.random.normal(k3, (nums, width), jnp.float32)
    bn_beta = 0.1 * jax.random.normal(k4, (nums, width), jnp.float32)

    out = res2conv1d_relu_bn(x, conv_w, conv_b, bn_gamma, bn_beta,
                             kernel_size=K, stride=1, padding=padding,
                             dilation=dilation, scale=scale)
    out = jax.block_until_ready(out)

    ref = res2_reference(x, conv_w, conv_b, bn_gamma, bn_beta,
                         kernel_size=K, padding=padding, dilation=dilation,
                         scale=scale)
    assert out.shape == (B, channels, T)
    err = float(jnp.max(jnp.abs(out - ref)))
    # kernel and reference both use bf16 MXU operands with f32 accumulation, so the
    # residual difference is only accumulation-order noise.
    assert err < 1e-2, f"max abs err {err}"


if __name__ == "__main__":
    key = jax.random.PRNGKey(0)
    k_a, k_b = jax.random.split(key)
    # main case: scale=4, k=3 dilated-conv style branch
    _run_case(k_a, B=2, channels=32, T=64, scale=4, K=3, padding=1, dilation=1)
    # scale=1 / kernel_size=1 path (no passthrough chunk, no shifted taps)
    _run_case(k_b, B=2, channels=8, T=64, scale=1, K=1, padding=0, dilation=1)
    print("KERNEL_OK")
</pallas_src>

<mosaic_0001>
module attributes {stable_mosaic.version = 11 : i64} {
  func.func @_res2_kernel(%arg0: i32, %arg1: memref<2x8x64xf32, #tpu.memory_space<vmem>>, %arg2: memref<3x3x8x8xbf16, #tpu.memory_space<vmem>>, %arg3: memref<3x8x1xf32, #tpu.memory_space<vmem>>, %arg4: memref<3x8x1xf32, #tpu.memory_space<vmem>>, %arg5: memref<3x8x1xf32, #tpu.memory_space<vmem>>, %arg6: memref<2x8x64xf32, #tpu.memory_space<vmem>>, %arg7: memref<2x8x64xf32, #tpu.memory_space<vmem>>) attributes {dimension_semantics = [#tpu.dimension_semantics<arbitrary>], iteration_bounds = array<i64: 4>, scalar_prefetch = 0 : i64, scratch_operands = 1 : i64, tpu.core_type = #tpu.core_type<tc>, window_params = [{transform_indices = @transform_0, window_bounds = array<i64: 2, 8, 64>}, {pipeline_mode = #tpu.pipeline_mode<synchronous>, transform_indices = @transform_1, window_bounds = array<i64: 3, 3, 8, 8>}, {pipeline_mode = #tpu.pipeline_mode<synchronous>, transform_indices = @transform_2, window_bounds = array<i64: 3, 8, 1>}, {pipeline_mode = #tpu.pipeline_mode<synchronous>, transform_indices = @transform_3, window_bounds = array<i64: 3, 8, 1>}, {pipeline_mode = #tpu.pipeline_mode<synchronous>, transform_indices = @transform_4, window_bounds = array<i64: 3, 8, 1>}, {transform_indices = @transform_5, window_bounds = array<i64: 2, 8, 64>}]} {
    %c0_i32 = arith.constant 0 : i32
    %0 = arith.cmpi eq, %arg0, %c0_i32 : i32
    %1 = arith.extui %0 : i1 to i32
    %c0_i32_0 = arith.constant 0 : i32
    %2 = arith.cmpi ne, %1, %c0_i32_0 : i32
    scf.if %2 {
      %cst = arith.constant 0.000000e+00 : f32
      %9 = vector.broadcast %cst : f32 to vector<2x8x64xf32>
      %c0 = arith.constant 0 : index
      %c0_4 = arith.constant 0 : index
      %c0_5 = arith.constant 0 : index
      %10 = vector.load %arg7[%c0, %c0_4, %c0_5] : memref<2x8x64xf32, #tpu.memory_space<vmem>>, vector<2x8x64xf32>
      tpu.vector_store %arg7[%c0, %c0_4, %c0_5], %9 {strides = array<i32>} : memref<2x8x64xf32, #tpu.memory_space<vmem>>, vector<2x8x64xf32>,
    } else {
    }
    %c3_i32 = arith.constant 3 : i32
    %3 = arith.cmpi slt, %arg0, %c3_i32 : i32
    %4 = arith.extui %3 : i1 to i32
    %c0_i32_1 = arith.constant 0 : i32
    %5 = arith.cmpi ne, %4, %c0_i32_1 : i32
    scf.if %5 {
      %c0 = arith.constant 0 : index
      %c0_4 = arith.constant 0 : index
      %c0_5 = arith.constant 0 : index
      %9 = vector.load %arg7[%c0, %c0_4, %c0_5] : memref<2x8x64xf32, #tpu.memory_space<vmem>>, vector<2x8x64xf32>
      %c0_6 = arith.constant 0 : index
      %c0_7 = arith.constant 0 : index
      %c0_8 = arith.constant 0 : index
      %10 = vector.load %arg1[%c0_6, %c0_7, %c0_8] : memref<2x8x64xf32, #tpu.memory_space<vmem>>, vector<2x8x64xf32>
      %11 = arith.addf %9, %10 : vector<2x8x64xf32>
      %12 = arith.truncf %11 : vector<2x8x64xf32> to vector<2x8x64xbf16>
      %13 = arith.index_cast %arg0 : i32 to index
      %c0_9 = arith.constant 0 : index
      %c0_10 = arith.constant 0 : index
      %c0_11 = arith.constant 0 : index
      %14 = vector.load %arg2[%13, %c0_9, %c0_10, %c0_11] : memref<3x3x8x8xbf16, #tpu.memory_space<vmem>>, vector<1x3x8x8xbf16>
      %15 = vector.shape_cast %14 : vector<1x3x8x8xbf16> to vector<3x8x8xbf16>
      %cst = arith.constant 0.000000e+00 : bf16
      %16 = vector.broadcast %cst : bf16 to vector<2x8x1xbf16>
      %17 = vector.extract_strided_slice %12 {offsets = [0, 0, 0], sizes = [2, 8, 63], strides = [1, 1, 1]} : vector<2x8x64xbf16> to vector<2x8x63xbf16>
      %18 = tpu.concatenate %16, %17 in 2 : vector<2x8x1xbf16>, vector<2x8x63xbf16> -> vector<2x8x64xbf16>
      %19 = vector.extract_strided_slice %15 {offsets = [0, 0, 0], sizes = [1, 8, 8], strides = [1, 1, 1]} : vector<3x8x8xbf16> to vector<1x8x8xbf16>
      %20 = vector.shape_cast %19 : vector<1x8x8xbf16> to vector<8x8xbf16>
      %21 = vector.shape_cast %20 : vector<8x8xbf16> to vector<1x8x8xbf16>
      %22 = vector.shape_cast %21 : vector<1x8x8xbf16> to vector<1x8x8xbf16>
      %23 = vector.broadcast %22 : vector<1x8x8xbf16> to vector<2x8x8xbf16>
      %cst_12 = arith.constant dense<0.000000e+00> : vector<2x8x64xf32>
      %24 = tpu.matmul %23, %18, %cst_12 {dimension_numbers = #tpu.dot_dimension_numbers<[2], [1], [1], [2], [0, 0, 0, 1, 1, 2], [0], [0]>} : vector<2x8x8xbf16>, vector<2x8x64xbf16>, vector<2x8x64xf32> -> vector<2x8x64xf32>
      %25 = vector.extract_strided_slice %15 {offsets = [1, 0, 0], sizes = [1, 8, 8], strides = [1, 1, 1]} : vector<3x8x8xbf16> to vector<1x8x8xbf16>
      %26 = vector.shape_cast %25 : vector<1x8x8xbf16> to vector<8x8xbf16>
      %27 = vector.shape_cast %26 : vector<8x8xbf16> to vector<1x8x8xbf16>
      %28 = vector.shape_cast %27 : vector<1x8x8xbf16> to vector<1x8x8xbf16>
      %29 = vector.broadcast %28 : vector<1x8x8xbf16> to vector<2x8x8xbf16>
      %cst_13 = arith.constant dense<0.000000e+00> : vector<2x8x64xf32>
      %30 = tpu.matmul %29, %12, %cst_13 {dimension_numbers = #tpu.dot_dimension_numbers<[2], [1], [1], [2], [0, 0, 0, 1, 1, 2], [0], [0]>} : vector<2x8x8xbf16>, vector<2x8x64xbf16>, vector<2x8x64xf32> -> vector<2x8x64xf32>
      %31 = arith.addf %24, %30 : vector<2x8x64xf32>
      %32 = vector.extract_strided_slice %12 {offsets = [0, 0, 1], sizes = [2, 8, 63], strides = [1, 1, 1]} : vector<2x8x64xbf16> to vector<2x8x63xbf16>
      %cst_14 = arith.constant 0.000000e+00 : bf16
      %33 = vector.broadcast %cst_14 : bf16 to vector<2x8x1xbf16>
      %34 = tpu.concatenate %32, %33 in 2 : vector<2x8x63xbf16>, vector<2x8x1xbf16> -> vector<2x8x64xbf16>
      %35 = vector.extract_strided_slice %15 {offsets = [2, 0, 0], sizes = [1, 8, 8], strides = [1, 1, 1]} : vector<3x8x8xbf16> to vector<1x8x8xbf16>
      %36 = vector.shape_cast %35 : vector<1x8x8xbf16> to vector<8x8xbf16>
      %37 = vector.shape_cast %36 : vector<8x8xbf16> to vector<1x8x8xbf16>
      %38 = vector.shape_cast %37 : vector<1x8x8xbf16> to vector<1x8x8xbf16>
      %39 = vector.broadcast %38 : vector<1x8x8xbf16> to vector<2x8x8xbf16>
      %cst_15 = arith.constant dense<0.000000e+00> : vector<2x8x64xf32>
      %40 = tpu.matmul %39, %34, %cst_15 {dimension_numbers = #tpu.dot_dimension_numbers<[2], [1], [1], [2], [0, 0, 0, 1, 1, 2], [0], [0]>} : vector<2x8x8xbf16>, vector<2x8x64xbf16>, vector<2x8x64xf32> -> vector<2x8x64xf32>
      %41 = arith.addf %31, %40 : vector<2x8x64xf32>
      %42 = arith.index_cast %arg0 : i32 to index
      %c0_16 = arith.constant 0 : index
      %c0_17 = arith.constant 0 : index
      %43 = vector.load %arg3[%42, %c0_16, %c0_17] : memref<3x8x1xf32, #tpu.memory_space<vmem>>, vector<1x8x1xf32>
      %44 = vector.broadcast %43 : vector<1x8x1xf32> to vector<2x8x64xf32>
      %45 = arith.addf %41, %44 : vector<2x8x64xf32>
      %cst_18 = arith.constant 0.000000e+00 : f32
      %46 = vector.broadcast %cst_18 : f32 to vector<2x8x64xf32>
      %47 = arith.maximumf %45, %46 : vector<2x8x64xf32>
      %cst_19 = arith.constant dense<0.000000e+00> : vector<8x64xf32>
      %48 = vector.multi_reduction <add>, %47, %cst_19 [0] : vector<2x8x64xf32> to vector<8x64xf32>
      %49 = vector.shape_cast %48 : vector<8x64xf32> to vector<1x8x64xf32>
      %cst_20 = arith.constant dense<0.000000e+00> : vector<1x8xf32>
      %50 = vector.multi_reduction <add>, %49, %cst_20 [2] : vector<1x8x64xf32> to vector<1x8xf32>
      %51 = vector.shape_cast %50 : vector<1x8xf32> to vector<1x8x1xf32>
      %cst_21 = arith.constant 7.812500e-03 : f32
      %52 = vector.broadcast %cst_21 : f32 to vector<1x8x1xf32>
      %53 = arith.mulf %51, %52 : vector<1x8x1xf32>
      %54 = vector.broadcast %53 : vector<1x8x1xf32> to vector<2x8x64xf32>
      %55 = arith.subf %47, %54 : vector<2x8x64xf32>
      %56 = arith.mulf %55, %55 : vector<2x8x64xf32>
      %cst_22 = arith.constant dense<0.000000e+00> : vector<8x64xf32>
      %57 = vector.multi_reduction <add>, %56, %cst_22 [0] : vector<2x8x64xf32> to vector<8x64xf32>
      %58 = vector.shape_cast %57 : vector<8x64xf32> to vector<1x8x64xf32>
      %cst_23 = arith.constant dense<0.000000e+00> : vector<1x8xf32>
      %59 = vector.multi_reduction <add>, %58, %cst_23 [2] : vector<1x8x64xf32> to vector<1x8xf32>
      %60 = vector.shape_cast %59 : vector<1x8xf32> to vector<1x8x1xf32>
      %cst_24 = arith.constant 7.812500e-03 : f32
      %61 = vector.broadcast %cst_24 : f32 to vector<1x8x1xf32>
      %62 = arith.mulf %60, %61 : vector<1x8x1xf32>
      %63 = arith.index_cast %arg0 : i32 to index
      %c0_25 = arith.constant 0 : index
      %c0_26 = arith.constant 0 : index
      %64 = vector.load %arg4[%63, %c0_25, %c0_26] : memref<3x8x1xf32, #tpu.memory_space<vmem>>, vector<1x8x1xf32>
      %65 = arith.index_cast %arg0 : i32 to index
      %c0_27 = arith.constant 0 : index
      %c0_28 = arith.constant 0 : index
      %66 = vector.load %arg5[%65, %c0_27, %c0_28] : memref<3x8x1xf32, #tpu.memory_space<vmem>>, vector<1x8x1xf32>
      %cst_29 = arith.constant 9.99999974E-6 : f32
      %67 = vector.broadcast %cst_29 : f32 to vector<1x8x1xf32>
      %68 = arith.addf %62, %67 : vector<1x8x1xf32>
      %69 = math.rsqrt %68 : vector<1x8x1xf32>
      %70 = arith.mulf %69, %64 : vector<1x8x1xf32>
      %71 = vector.broadcast %70 : vector<1x8x1xf32> to vector<2x8x64xf32>
      %72 = arith.mulf %55, %71 : vector<2x8x64xf32>
      %73 = vector.broadcast %66 : vector<1x8x1xf32> to vector<2x8x64xf32>
      %74 = arith.addf %72, %73 : vector<2x8x64xf32>
      %c0_30 = arith.constant 0 : index
      %c0_31 = arith.constant 0 : index
      %c0_32 = arith.constant 0 : index
      %75 = vector.load %arg7[%c0_30, %c0_31, %c0_32] : memref<2x8x64xf32, #tpu.memory_space<vmem>>, vector<2x8x64xf32>
      tpu.vector_store %arg7[%c0_30, %c0_31, %c0_32], %74 {strides = array<i32>} : memref<2x8x64xf32, #tpu.memory_space<vmem>>, vector<2x8x64xf32>,
      %c0_33 = arith.constant 0 : index
      %c0_34 = arith.constant 0 : index
      %c0_35 = arith.constant 0 : index
      %76 = vector.load %arg6[%c0_33, %c0_34, %c0_35] : memref<2x8x64xf32, #tpu.memory_space<vmem>>, vector<2x8x64xf32>
      tpu.vector_store %arg6[%c0_33, %c0_34, %c0_35], %74 {strides = array<i32>} : memref<2x8x64xf32, #tpu.memory_space<vmem>>, vector<2x8x64xf32>,
    } else {
    }
    %c3_i32_2 = arith.constant 3 : i32
    %6 = arith.cmpi eq, %arg0, %c3_i32_2 : i32
    %7 = arith.extui %6 : i1 to i32
    %c0_i32_3 = arith.constant 0 : i32
    %8 = arith.cmpi ne, %7, %c0_i32_3 : i32
    scf.if %8 {
      %c0 = arith.constant 0 : index
      %c0_4 = arith.constant 0 : index
      %c0_5 = arith.constant 0 : index
      %9 = vector.load %arg1[%c0, %c0_4, %c0_5] : memref<2x8x64xf32, #tpu.memory_space<vmem>>, vector<2x8x64xf32>
      %c0_6 = arith.constant 0 : index
      %c0_7 = arith.constant 0 : index
      %c0_8 = arith.constant 0 : index
      %10 = vector.load %arg6[%c0_6, %c0_7, %c0_8] : memref<2x8x64xf32, #tpu.memory_space<vmem>>, vector<2x8x64xf32>
      tpu.vector_store %arg6[%c0_6, %c0_7, %c0_8], %9 {strides = array<i32>} : memref<2x8x64xf32, #tpu.memory_space<vmem>>, vector<2x8x64xf32>,
    } else {
    }
    return
  }
  func.func @transform_0(%arg0: i32) -> (i32, i32, i32) {
    %c0_i32 = arith.constant 0 : i32
    %c0_i32_0 = arith.constant 0 : i32
    %c0_i32_1 = arith.constant 0 : i32
    return %c0_i32, %arg0, %c0_i32_0 : i32, i32, i32
  }
  func.func @transform_1(%arg0: i32) -> (i32, i32, i32, i32) {
    %c0_i32 = arith.constant 0 : i32
    %c0_i32_0 = arith.constant 0 : i32
    %c0_i32_1 = arith.constant 0 : i32
    %c0_i32_2 = arith.constant 0 : i32
    %c0_i32_3 = arith.constant 0 : i32
    return %c0_i32, %c0_i32_0, %c0_i32_1, %c0_i32_2 : i32, i32, i32, i32
  }
  func.func @transform_2(%arg0: i32) -> (i32, i32, i32) {
    %c0_i32 = arith.constant 0 : i32
    %c0_i32_0 = arith.constant 0 : i32
    %c0_i32_1 = arith.constant 0 : i32
    %c0_i32_2 = arith.constant 0 : i32
    return %c0_i32, %c0_i32_0, %c0_i32_1 : i32, i32, i32
  }
  func.func @transform_3(%arg0: i32) -> (i32, i32, i32) {
    %c0_i32 = arith.constant 0 : i32
    %c0_i32_0 = arith.constant 0 : i32
    %c0_i32_1 = arith.constant 0 : i32
    %c0_i32_2 = arith.constant 0 : i32
    return %c0_i32, %c0_i32_0, %c0_i32_1 : i32, i32, i32
  }
  func.func @transform_4(%arg0: i32) -> (i32, i32, i32) {
    %c0_i32 = arith.constant 0 : i32
    %c0_i32_0 = arith.constant 0 : i32
    %c0_i32_1 = arith.constant 0 : i32
    %c0_i32_2 = arith.constant 0 : i32
    return %c0_i32, %c0_i32_0, %c0_i32_1 : i32, i32, i32
  }
  func.func @transform_5(%arg0: i32) -> (i32, i32, i32) {
    %c0_i32 = arith.constant 0 : i32
    %c0_i32_0 = arith.constant 0 : i32
    %c0_i32_1 = arith.constant 0 : i32
    return %c0_i32, %arg0, %c0_i32_0 : i32, i32, i32
  }
}

</mosaic_0001>

<llo_original>
// kernel: tpu_custom_call.1
$region0: #{tpu_custom_call.1}
  #allocation0 [shape = 'u32[]', space=smem, size = 0x4, offset = 0x4, fixed_abs, tag = 'smem constant byte address 0x4 - core index']
  #allocation1 [shape = 'u32[144,128]{1,0:T(1,128)}', space=vmem, size = 0x12000, scoped, tag = 'internal scratch']
  #allocation2 [shape = 'f32[2,8,64]{2,1,0:T(8,128)}', space=vmem, size = 0x2000, scoped, tag = 'scratch operand']
  %s0 = inlined_call_operand.vmem [shape: f32[2,32,64], index: 0, kind: input, shape index: {}]
  %s1 = inlined_call_operand.hbm [shape: bf16[3,3,8,8], index: 1, kind: input, shape index: {}]
  %s2 = inlined_call_operand.vmem [shape: f32[3,8,1], index: 2, kind: input, shape index: {}]
  %s3 = inlined_call_operand.vmem [shape: f32[3,8,1], index: 3, kind: input, shape index: {}]
  %s4 = inlined_call_operand.vmem [shape: f32[3,8,1], index: 4, kind: input, shape index: {}]
  %s5 = inlined_call_operand.hbm [shape: f32[2,32,64], index: 5, kind: output, shape index: {}]
  %s6 = sld [smem:[#allocation0]]
  $region107: #{tpu_custom_call.1} parent=0
    _
  %s8 = ssub.s32 1, %s6
  %s9 = scalar_select 0, %s8, %s6
  $region1: #{tpu_custom_call.1} parent=0
    #allocation3 [shape = 'u8[16384]{0}', space=vmem, size = 0x4000, scoped, tag = 'input window, operand 0']
    #allocation4 [shape = 'u8[18432]{0}', space=vmem, size = 0x4800, scoped, tag = 'input window, operand 1, single buffered']
    #allocation5 [shape = 's32[2]{0}', space=sflag, size = 0x8, scoped, tag = 'scoped memory for tpu_custom_call.1']
    #allocation6 [shape = 's32[2]{0}', space=sflag, size = 0x8, scoped, tag = 'scoped memory for tpu_custom_call.1']
    #allocation7 [shape = 'u8[16384]{0}', space=vmem, size = 0x4000, scoped, tag = 'output window, operand 0']
    %10 = vsyncpa [#allocation5], 0
    %11 = vsyncpa [#allocation6], 0
    %s12 = scalar_lea.sflag [#allocation6], 1
    %13 = vsyncpa %s12, 0
    loop: start=0, step=1, limit=6
    $region2: #{tpu_custom_call.1} parent=1 // loop_pre_header
      _
    $region3: #{tpu_custom_call.1} parent=1 // loop_header
      %s15 = sphi 0, %s19
      %p16 = scmp.ge.s32.totalorder %s15, 6
      %s25 = sphi 0, %s27
      %s28 = sphi 0, %s25
      %s29 = sphi 0, %s28
      %s45 = sphi 0, %s29
      %s49 = sphi 0, %s49
      %s51 = sphi 0, %s49
      %s52 = sphi 0, %s51
      %s66 = sphi 0, %s52
      %s70 = sphi 0, %s70
      %s72 = sphi 0, %s70
      %s73 = sphi 0, %s72
      %s87 = sphi 0, %s73
      %s91 = sphi 0, %s91
      %s93 = sphi 0, %s91
      %s94 = sphi 0, %s93
      %s108 = sphi 0, %s94
      %s112 = sphi 0, %s112
      %s114 = sphi 0, %s112
      %s115 = sphi 0, %s114
      %s129 = sphi 0, %s115
      %s135 = sphi 0, %s137
      %s138 = sphi 0, %s135
      %s139 = sphi 0, %s138
      %s155 = sphi 0, %s139
    $region4: #{tpu_custom_call.1} parent=1 // loop_header_branch
      %18 = sbr.rel (%p16) target = $region8
    $region5: #{tpu_custom_call.1} parent=1 // loop_body
      %s20 = ssub.s32 %s15, 1
      %s21 = ssub.s32 %s15, 2
      %s22 = sadd.s32 %s15, 1
      %s23 = ssub.s32 %s15, %s22
      %p24 = scmp.eq.s32.totalorder %s23, 0
      %s26 = sadd.s32 %s25, 1
      %s27 = scalar_select %p24, %s25, %s26
      %p30 = pneg %p24
      %p31 = scmp.eq.s32.totalorder %s15, 3
      %p32 = por %p30, %p31
      %p33 = scmp.ne.s32.totalorder %s25, %s28
      %p34 = scmp.eq.s32.totalorder %s15, 0
      %p35 = por %p33, %p34
      %p36 = scmp.ne.s32.totalorder %s25, %s28
      %p37 = scmp.eq.s32.totalorder %s20, 3
      %p38 = por %p36, %p37
      %p39 = scmp.ne.s32.totalorder %s28, %s29
      %p40 = scmp.eq.s32.totalorder %s20, 0
      %p41 = por %p39, %p40
      %p42 = scmp.ne.s32.totalorder %s28, %s29
      %p43 = scmp.eq.s32.totalorder %s21, 3
      %p44 = por %p42, %p43
      %p46 = scmp.ne.s32.totalorder %s29, %s45
      %p47 = scmp.eq.s32.totalorder %s21, 0
      %p48 = por %p46, %p47
      %s50 = sadd.s32 %s49, 1
      %p53 = scmp.eq.s32.totalorder %s15, 3
      %p54 = scmp.ne.s32.totalorder %s49, %s51
      %p55 = scmp.eq.s32.totalorder %s15, 0
      %p56 = por %p54, %p55
      %p57 = scmp.ne.s32.totalorder %s49, %s51
      %p58 = scmp.eq.s32.totalorder %s20, 3
      %p59 = por %p57, %p58
      %p60 = scmp.ne.s32.totalorder %s51, %s52
      %p61 = scmp.eq.s32.totalorder %s20, 0
      %p62 = por %p60, %p61
      %p63 = scmp.ne.s32.totalorder %s51, %s52
      %p64 = scmp.eq.s32.totalorder %s21, 3
      %p65 = por %p63, %p64
      %p67 = scmp.ne.s32.totalorder %s52, %s66
      %p68 = scmp.eq.s32.totalorder %s21, 0
      %p69 = por %p67, %p68
      %s71 = sadd.s32 %s70, 1
      %p74 = scmp.eq.s32.totalorder %s15, 3
      %p75 = scmp.ne.s32.totalorder %s70, %s72
      %p76 = scmp.eq.s32.totalorder %s15, 0
      %p77 = por %p75, %p76
      %p78 = scmp.ne.s32.totalorder %s70, %s72
      %p79 = scmp.eq.s32.totalorder %s20, 3
      %p80 = por %p78, %p79
      %p81 = scmp.ne.s32.totalorder %s72, %s73
      %p82 = scmp.eq.s32.totalorder %s20, 0
      %p83 = por %p81, %p82
      %p84 = scmp.ne.s32.totalorder %s72, %s73
      %p85 = scmp.eq.s32.totalorder %s21, 3
      %p86 = por %p84, %p85
      %p88 = scmp.ne.s32.totalorder %s73, %s87
      %p89 = scmp.eq.s32.totalorder %s21, 0
      %p90 = por %p88, %p89
      %s92 = sadd.s32 %s91, 1
      %p95 = scmp.eq.s32.totalorder %s15, 3
      %p96 = scmp.ne.s32.totalorder %s91, %s93
      %p97 = scmp.eq.s32.totalorder %s15, 0
      %p98 = por %p96, %p97
      %p99 = scmp.ne.s32.totalorder %s91, %s93
      %p100 = scmp.eq.s32.totalorder %s20, 3
      %p101 = por %p99, %p100
      %p102 = scmp.ne.s32.totalorder %s93, %s94
      %p103 = scmp.eq.s32.totalorder %s20, 0
      %p104 = por %p102, %p103
      %p105 = scmp.ne.s32.totalorder %s93, %s94
      %p106 = scmp.eq.s32.totalorder %s21, 3
      %p107 = por %p105, %p106
      %p109 = scmp.ne.s32.totalorder %s94, %s108
      %p110 = scmp.eq.s32.totalorder %s21, 0
      %p111 = por %p109, %p110
      %s113 = sadd.s32 %s112, 1
      %p116 = scmp.eq.s32.totalorder %s15, 3
      %p117 = scmp.ne.s32.totalorder %s112, %s114
      %p118 = scmp.eq.s32.totalorder %s15, 0
      %p119 = por %p117, %p118
      %p120 = scmp.ne.s32.totalorder %s112, %s114
      %p121 = scmp.eq.s32.totalorder %s20, 3
      %p122 = por %p120, %p121
      %p123 = scmp.ne.s32.totalorder %s114, %s115
      %p124 = scmp.eq.s32.totalorder %s20, 0
      %p125 = por %p123, %p124
      %p126 = scmp.ne.s32.totalorder %s114, %s115
      %p127 = scmp.eq.s32.totalorder %s21, 3
      %p128 = por %p126, %p127
      %p130 = scmp.ne.s32.totalorder %s115, %s129
      %p131 = scmp.eq.s32.totalorder %s21, 0
      %p132 = por %p130, %p131
      %s133 = ssub.s32 %s15, %s22
      %p134 = scmp.eq.s32.totalorder %s133, 0
      %s136 = sadd.s32 %s135, 1
      %s137 = scalar_select %p134, %s135, %s136
      %p140 = pneg %p134
      %p141 = scmp.eq.s32.totalorder %s15, 3
      %p142 = por %p140, %p141
      %p143 = scmp.ne.s32.totalorder %s135, %s138
      %p144 = scmp.eq.s32.totalorder %s15, 0
      %p145 = por %p143, %p144
      %p146 = scmp.ne.s32.totalorder %s135, %s138
      %p147 = scmp.eq.s32.totalorder %s20, 3
      %p148 = por %p146, %p147
      %p149 = scmp.ne.s32.totalorder %s138, %s139
      %p150 = scmp.eq.s32.totalorder %s20, 0
      %p151 = por %p149, %p150
      %p152 = scmp.ne.s32.totalorder %s138, %s139
      %p153 = scmp.eq.s32.totalorder %s21, 3
      %p154 = por %p152, %p153
      %p156 = scmp.ne.s32.totalorder %s139, %s155
      %p157 = scmp.eq.s32.totalorder %s21, 0
      %p158 = por %p156, %p157
      %p159 = scmp.le.s32.totalorder 1, %s15
      %p160 = scmp.lt.s32.totalorder %s15, 5
      %p161 = pnand %p159, %p160
      %p162 = pneg %p161
      // Predicated region
      $region9: #{tpu_custom_call.1} parent=5 // pred_check
        _
      $region10: #{tpu_custom_call.1} parent=5 // pred_check_branch
        %164 = sbr.rel (%p161) target = $region12
      $region11: #{tpu_custom_call.1} parent=5 // pred_region
        %s165 = ssub.s32 %s15, 1
        // Predicated region
        $region13: #{tpu_custom_call.1} parent=11 // pred_check
          %p166 = pneg %p62
        $region14: #{tpu_custom_call.1} parent=11 // pred_check_branch
          %168 = sbr.rel (%p166) target = $region16
        $region15: #{tpu_custom_call.1} parent=11 // pred_region
          %s170 = ssub.s32 576, 576
          %171 = vsyncadd [#allocation5], %s170
          %s172 = sshll.u32 [#allocation4], 4
          %s173 = int_to_ptr.vmem [resolvable:$true] %s172
          %178 = dma.hbm_to_vmem [thread:$0]  %s1, 576, %s173, [#allocation5], 64, 64, 4
        $region16: #{tpu_custom_call.1} parent=11 // pred_fallthru
          _
        // Predicated region
        $region17: #{tpu_custom_call.1} parent=11 // pred_check
          %p179 = pneg %p83
        $region18: #{tpu_custom_call.1} parent=11 // pred_check_branch
          %181 = sbr.rel (%p179) target = $region20
        $region19: #{tpu_custom_call.1} parent=11 // pred_region
          _
        $region20: #{tpu_custom_call.1} parent=11 // pred_fallthru
          _
        // Predicated region
        $region21: #{tpu_custom_call.1} parent=11 // pred_check
          %p182 = pneg %p104
        $region22: #{tpu_custom_call.1} parent=11 // pred_check_branch
          %184 = sbr.rel (%p182) target = $region24
        $region23: #{tpu_custom_call.1} parent=11 // pred_region
          _
        $region24: #{tpu_custom_call.1} parent=11 // pred_fallthru
          _
        // Predicated region
        $region25: #{tpu_custom_call.1} parent=11 // pred_check
          %p185 = pneg %p125
        $region26: #{tpu_custom_call.1} parent=11 // pred_check_branch
          %187 = sbr.rel (%p185) target = $region28
        $region27: #{tpu_custom_call.1} parent=11 // pred_region
          _
        $region28: #{tpu_custom_call.1} parent=11 // pred_fallthru
          _
      $region12: #{tpu_custom_call.1} parent=5 // pred_fallthru
        _
      %p188 = scmp.lt.s32.totalorder %s15, 4
      // Predicated region
      $region29: #{tpu_custom_call.1} parent=5 // pred_check
        %p189 = pneg %p188
      $region30: #{tpu_custom_call.1} parent=5 // pred_check_branch
        %191 = sbr.rel (%p189) target = $region32
      $region31: #{tpu_custom_call.1} parent=5 // pred_region
        // Predicated region
        $region33: #{tpu_custom_call.1} parent=31 // pred_check
          %p192 = pneg %p35
        $region34: #{tpu_custom_call.1} parent=31 // pred_check_branch
          %194 = sbr.rel (%p192) target = $region36
        $region35: #{tpu_custom_call.1} parent=31 // pred_region
          %s195 = sand.u32 %s25, 1
          %s196 = sand.u32 %s25, 1
          %s197 = smul.addr %s196, 16
          %s198 = scalar_lea.vmem [#allocation3], %s197
          %s199 = smul.addr %s15, 8
          %s200 = scalar_lea.vmem %s0, %s199
          // Predicated region
          $region37: #{tpu_custom_call.1} parent=35 // pred_check
            _
          $region38: #{tpu_custom_call.1} parent=35 // pred_check_branch
            %202 = sbr.rel (0) target = $region40
          $region39: #{tpu_custom_call.1} parent=35 // pred_region
            // Predicated region
            $region41: #{tpu_custom_call.1} parent=39 // pred_check
              _
            $region42: #{tpu_custom_call.1} parent=39 // pred_check_branch
              %204 = sbr.rel (0) target = $region44
            $region43: #{tpu_custom_call.1} parent=39 // pred_region
              // Predicated region
              $region56: #{tpu_custom_call.1} parent=43 // pred_check
                _
              $region57: #{tpu_custom_call.1} parent=43 // pred_check_branch
                %221 = sbr.rel (0) target = $region59
              $region58: #{tpu_custom_call.1} parent=43 // pred_region
                loop: start=0, step=1, limit=1
                $region60: #{tpu_custom_call.1} parent=58 // loop_pre_header
                  _
                $region61: #{tpu_custom_call.1} parent=58 // loop_header
                  %s223 = sphi 0, %s227
                  %p224 = scmp.ge.s32.totalorder %s223, 1
                  %s228 = sphi %s200, %s200
                  %s229 = sphi %s198, %s198
                $region62: #{tpu_custom_call.1} parent=58 // loop_header_branch
                  %226 = sbr.rel (%p224) target = $region66
                $region63: #{tpu_custom_call.1} parent=58 // loop_body
                  %v230 = vld [vmem:[%s228] sm:$0xff]
                  %231 = vst [vmem:[%s229] sm:$0xff] %v230
                  %v232 = vld [vmem:[%s228 + $0x20] sm:$0xff]
                  %233 = vst [vmem:[%s229 + $0x8] sm:$0xff] %v232
                $region64: #{tpu_custom_call.1} parent=58 // loop_footer
                  %s227 = sadd.s32 1, %s223
                $region65: #{tpu_custom_call.1} parent=58 // loop_footer_branch
                  %222 = sbr.rel target = $region61
                $region66: #{tpu_custom_call.1} parent=58 // loop_exit
                  _
              $region59: #{tpu_custom_call.1} parent=43 // pred_fallthru
                _
              // Predicated region
              $region67: #{tpu_custom_call.1} parent=43 // pred_check
                _
              $region68: #{tpu_custom_call.1} parent=43 // pred_check_branch
                %235 = sbr.rel target = $region70
              $region69: #{tpu_custom_call.1} parent=43 // pred_region
                _
              $region70: #{tpu_custom_call.1} parent=43 // pred_fallthru
                _
            $region44: #{tpu_custom_call.1} parent=39 // pred_fallthru
              _
            // Predicated region
            $region45: #{tpu_custom_call.1} parent=39 // pred_check
              _
            $region46: #{tpu_custom_call.1} parent=39 // pred_check_branch
              %206 = sbr.rel target = $region48
            $region47: #{tpu_custom_call.1} parent=39 // pred_region
              loop: start=0, step=1, limit=1
              $region49: #{tpu_custom_call.1} parent=47 // loop_pre_header
                _
              $region50: #{tpu_custom_call.1} parent=47 // loop_header
                %s209 = sphi 0, %s213
                %p210 = scmp.ge.s32.totalorder %s209, 1
                %s214 = sphi %s200, %s200
                %s215 = sphi %s198, %s198
              $region51: #{tpu_custom_call.1} parent=47 // loop_header_branch
                %212 = sbr.rel (%p210) target = $region55
              $region52: #{tpu_custom_call.1} parent=47 // loop_body
                %v216 = vld [vmem:[%s214] sm:$0xff]
                %217 = vst [vmem:[%s215] sm:$0xff] %v216
                %v218 = vld [vmem:[%s214 + $0x20] sm:$0xff]
                %219 = vst [vmem:[%s215 + $0x8] sm:$0xff] %v218
              $region53: #{tpu_custom_call.1} parent=47 // loop_footer
                %s213 = sadd.s32 1, %s209
              $region54: #{tpu_custom_call.1} parent=47 // loop_footer_branch
                %208 = sbr.rel target = $region50
              $region55: #{tpu_custom_call.1} parent=47 // loop_exit
                _
            $region48: #{tpu_custom_call.1} parent=39 // pred_fallthru
              _
          $region40: #{tpu_custom_call.1} parent=35 // pred_fallthru
            _
          %236 = vnop
        $region36: #{tpu_custom_call.1} parent=31 // pred_fallthru
          _
      $region32: #{tpu_custom_call.1} parent=5 // pred_fallthru
        _
      %p237 = scmp.le.s32.totalorder 1, %s15
      %p238 = scmp.lt.s32.totalorder %s15, 5
      %p239 = pnand %p237, %p238
      %p240 = pneg %p239
      // Predicated region
      $region71: #{tpu_custom_call.1} parent=5 // pred_check
        _
      $region72: #{tpu_custom_call.1} parent=5 // pred_check_branch
        %242 = sbr.rel (%p239) target = $region74
      $region73: #{tpu_custom_call.1} parent=5 // pred_region
        %s243 = ssub.s32 %s15, 1
        %s244 = sand.u32 %s28, 1
        %s245 = sand.u32 %s28, 1
        %s246 = smul.addr %s245, 16
        %s247 = scalar_lea.vmem [#allocation3], %s246
        // Predicated region
        $region75: #{tpu_custom_call.1} parent=73 // pred_check
          %p248 = pneg %p41
        $region76: #{tpu_custom_call.1} parent=73 // pred_check_branch
          %250 = sbr.rel (%p248) target = $region78
        $region77: #{tpu_custom_call.1} parent=73 // pred_region
          _
        $region78: #{tpu_custom_call.1} parent=73 // pred_fallthru
          _
        // Predicated region
        $region79: #{tpu_custom_call.1} parent=73 // pred_check
          %p251 = pneg %p62
        $region80: #{tpu_custom_call.1} parent=73 // pred_check_branch
          %253 = sbr.rel (%p251) target = $region82
        $region81: #{tpu_custom_call.1} parent=73 // pred_region
          %254 = dma.done [#allocation5], 576
        $region82: #{tpu_custom_call.1} parent=73 // pred_fallthru
          _
        %s255 = sand.u32 %s28, 1
        %s256 = sand.u32 %s28, 1
        %s257 = smul.addr %s256, 16
        %s258 = scalar_lea.vmem [#allocation3], %s257
        %p259 = pneg %p41
        %p260 = pneg %p38
        %p261 = pneg %p62
        %p262 = pneg %p59
        %p263 = pneg %p83
        %p264 = pneg %p80
        %p265 = pneg %p104
        %p266 = pneg %p101
        %p267 = pneg %p125
        %p268 = pneg %p122
        %p269 = pneg %p151
        %p270 = pneg %p148
        %s271 = sand.u32 %s138, 1
        %s272 = scalar_lea.sflag [#allocation6], %s271
        %s273 = sand.u32 %s138, 1
        %s274 = smul.addr %s273, 16
        %s275 = scalar_lea.vmem [#allocation7], %s274
        %p277 = scmp.eq.s32.totalorder %s20, 0
        // Predicated region
        $region83: #{tpu_custom_call.1} parent=73 // pred_check
          %p278 = pneg %p277
        $region84: #{tpu_custom_call.1} parent=73 // pred_check_branch
          %280 = sbr.rel (%p278) target = $region86
        $region85: #{tpu_custom_call.1} parent=73 // pred_region
          %vm281 = vcmask 523264
          %282 = vst.msk [vmem:[#allocation2] sm:$0xff] %vm281, 0.0
          %283 = vst.msk [vmem:[#allocation2 + $0x8] sm:$0xff] %vm281, 0.0
        $region86: #{tpu_custom_call.1} parent=73 // pred_fallthru
          _
        %p284 = scmp.lt.s32.totalorder %s20, 3
        // Predicated region
        $region87: #{tpu_custom_call.1} parent=73 // pred_check
          %p285 = pneg %p284
        $region88: #{tpu_custom_call.1} parent=73 // pred_check_branch
          %287 = sbr.rel (%p285) target = $region90
        $region89: #{tpu_custom_call.1} parent=73 // pred_region
          %v288 = vld [vmem:[#allocation2] sm:$0xff]
          %v289 = vld [vmem:[#allocation2 + $0x8] sm:$0xff]
          %v290 = vld [vmem:[%s247] sm:$0xff]
          %v291 = vld [vmem:[%s247 + $0x8] sm:$0xff]
          %v292 = vadd.f32 %v288, %v290
          %v293 = vadd.f32 %v289, %v291
          %v294 = vpack.c.bf16 %v292, %v292
          %v295 = vpack.c.bf16 %v293, %v293
          %s296 = smul.u32 %s20, 3
          %s297 = smul.addr %s296, 4
          %s298 = scalar_lea.vmem [#allocation4], %s297
          %v299 = vld [vmem:[%s298] sm:$0xf]
          %v300 = vld [vmem:[%s298 + $0x4] sm:$0xf]
          %v301 = vld [vmem:[%s298 + $0x8] sm:$0xf]
          %304 = vrot.lane.b32.xlu0 %v294, 1
          %v305 = vpop.permute.xlu0 %304
          %306 = vrot.lane.b32.xlu0 %v295, 1
          %v307 = vpop.permute.xlu0 %306
          %vm308 = vcmask 7168
          %v311 = vsel %vm308, 0, %v305
          %v313 = vsel %vm308, 0, %v307
          %vm314 = vcmask 64512
          %v316 = vsel %vm314, %v300, 0
          %vm318 = vcmask 1043456
          %v320 = vsel %vm318, %v294, 0
          %322 = vmatprep.subr.bf16.mxu0 0
          %323 = vmatpush1.bf16.msra.mxu0 %v320
          %324 = vmatprep.subr.bf16.mxu0 0
          %325 = vmatpush1.bf16.msra.mxu0 0
          %326 = vmatprep.subr.bf16.mxu0 0
          %327 = vmatpush1.bf16.msra.mxu0 0
          %328 = vmatprep.subr.bf16.mxu0 0
          %329 = vmatpush1.bf16.msra.mxu0 0
          %330 = vmatprep.subr.bf16.mxu0 0
          %331 = vmatpush1.bf16.msra.mxu0 0
          %332 = vmatprep.subr.bf16.mxu0 0
          %333 = vmatpush1.bf16.msra.mxu0 0
          %334 = vmatprep.subr.bf16.mxu0 0
          %335 = vmatpush1.bf16.msra.mxu0 0
          %336 = vmatprep.subr.bf16.mxu0 0
          %337 = vmatpush1.bf16.msra.mxu0 0
          %338 = vmatprep.subr.bf16.mxu0 0
          %339 = vmatpush1.bf16.msra.mxu0 0
          %340 = vmatprep.subr.bf16.mxu0 0
          %341 = vmatpush1.bf16.msra.mxu0 0
          %342 = vmatprep.subr.bf16.mxu0 0
          %343 = vmatpush1.bf16.msra.mxu0 0
          %344 = vmatprep.subr.bf16.mxu0 0
          %345 = vmatpush1.bf16.msra.mxu0 0
          %346 = vmatprep.subr.bf16.mxu0 0
          %347 = vmatpush1.bf16.msra.mxu0 0
          %348 = vmatprep.subr.bf16.mxu0 0
          %349 = vmatpush1.bf16.msra.mxu0 0
          %350 = vmatprep.subr.bf16.mxu0 0
          %351 = vmatpush1.bf16.msra.mxu0 0
          %352 = vmatprep.subr.bf16.mxu0 0
          %353 = vmatpush1.bf16.msra.mxu0 0
          %354 = vmatprep.mubr.bf16.mxu0 0
          %355 = vmatmul.mubr.bf16.gmra.mrb[0].mxu0 %v316
          %v356 = vpop.f32.mrb[0].mxu0
          %v357 = vadd.f32 0.0, %v356
          %v358 = vpop.f32.mrb[0].mxu0
          %v359 = vpop.f32.mrb[0].mxu0
          %v360 = vpop.f32.mrb[0].mxu0
          %361 = vdwg.mxu0
          %v363 = vsel %vm318, %v295, 0
          %365 = vmatprep.subr.bf16.mxu0 0
          %366 = vmatpush1.bf16.msra.mxu0 %v363
          %367 = vmatprep.subr.bf16.mxu0 0
          %368 = vmatpush1.bf16.msra.mxu0 0
          %369 = vmatprep.subr.bf16.mxu0 0
          %370 = vmatpush1.bf16.msra.mxu0 0
          %371 = vmatprep.subr.bf16.mxu0 0
          %372 = vmatpush1.bf16.msra.mxu0 0
          %373 = vmatprep.subr.bf16.mxu0 0
          %374 = vmatpush1.bf16.msra.mxu0 0
          %375 = vmatprep.subr.bf16.mxu0 0
          %376 = vmatpush1.bf16.msra.mxu0 0
          %377 = vmatprep.subr.bf16.mxu0 0
          %378 = vmatpush1.bf16.msra.mxu0 0
          %379 = vmatprep.subr.bf16.mxu0 0
          %380 = vmatpush1.bf16.msra.mxu0 0
          %381 = vmatprep.subr.bf16.mxu0 0
          %382 = vmatpush1.bf16.msra.mxu0 0
          %383 = vmatprep.subr.bf16.mxu0 0
          %384 = vmatpush1.bf16.msra.mxu0 0
          %385 = vmatprep.subr.bf16.mxu0 0
          %386 = vmatpush1.bf16.msra.mxu0 0
          %387 = vmatprep.subr.bf16.mxu0 0
          %388 = vmatpush1.bf16.msra.mxu0 0
          %389 = vmatprep.subr.bf16.mxu0 0
          %390 = vmatpush1.bf16.msra.mxu0 0
          %391 = vmatprep.subr.bf16.mxu0 0
          %392 = vmatpush1.bf16.msra.mxu0 0
          %393 = vmatprep.subr.bf16.mxu0 0
          %394 = vmatpush1.bf16.msra.mxu0 0
          %395 = vmatprep.subr.bf16.mxu0 0
          %396 = vmatpush1.bf16.msra.mxu0 0
          %397 = vmatprep.mubr.bf16.mxu0 0
          %398 = vmatmul.mubr.bf16.gmra.mrb[0].mxu0 %v316
          %v399 = vpop.f32.mrb[0].mxu0
          %v400 = vadd.f32 0.0, %v399
          %v401 = vpop.f32.mrb[0].mxu0
          %v402 = vpop.f32.mrb[0].mxu0
          %v403 = vpop.f32.mrb[0].mxu0
          %404 = vdwg.mxu0
          %v406 = vsel %vm314, %v299, 0
          %v408 = vsel %vm318, %v311, 0
          %410 = vmatprep.subr.bf16.mxu0 0
          %411 = vmatpush1.bf16.msra.mxu0 %v408
          %412 = vmatprep.subr.bf16.mxu0 0
          %413 = vmatpush1.bf16.msra.mxu0 0
          %414 = vmatprep.subr.bf16.mxu0 0
          %415 = vmatpush1.bf16.msra.mxu0 0
          %416 = vmatprep.subr.bf16.mxu0 0
          %417 = vmatpush1.bf16.msra.mxu0 0
          %418 = vmatprep.subr.bf16.mxu0 0
          %419 = vmatpush1.bf16.msra.mxu0 0
          %420 = vmatprep.subr.bf16.mxu0 0
          %421 = vmatpush1.bf16.msra.mxu0 0
          %422 = vmatprep.subr.bf16.mxu0 0
          %423 = vmatpush1.bf16.msra.mxu0 0
          %424 = vmatprep.subr.bf16.mxu0 0
          %425 = vmatpush1.bf16.msra.mxu0 0
          %426 = vmatprep.subr.bf16.mxu0 0
          %427 = vmatpush1.bf16.msra.mxu0 0
          %428 = vmatprep.subr.bf16.mxu0 0
          %429 = vmatpush1.bf16.msra.mxu0 0
          %430 = vmatprep.subr.bf16.mxu0 0
          %431 = vmatpush1.bf16.msra.mxu0 0
          %432 = vmatprep.subr.bf16.mxu0 0
          %433 = vmatpush1.bf16.msra.mxu0 0
          %434 = vmatprep.subr.bf16.mxu0 0
          %435 = vmatpush1.bf16.msra.mxu0 0
          %436 = vmatprep.subr.bf16.mxu0 0
          %437 = vmatpush1.bf16.msra.mxu0 0
          %438 = vmatprep.subr.bf16.mxu0 0
          %439 = vmatpush1.bf16.msra.mxu0 0
          %440 = vmatprep.subr.bf16.mxu0 0
          %441 = vmatpush1.bf16.msra.mxu0 0
          %442 = vmatprep.mubr.bf16.mxu0 0
          %443 = vmatmul.mubr.bf16.gmra.mrb[0].mxu0 %v406
          %v444 = vpop.f32.mrb[0].mxu0
          %v445 = vadd.f32 %v357, %v444
          %v446 = vpop.f32.mrb[0].mxu0
          %v447 = vpop.f32.mrb[0].mxu0
          %v448 = vpop.f32.mrb[0].mxu0
          %449 = vdwg.mxu0
          %v450 = vsel %vm318, %v313, 0
          %452 = vmatprep.subr.bf16.mxu0 0
          %453 = vmatpush1.bf16.msra.mxu0 %v450
          %454 = vmatprep.subr.bf16.mxu0 0
          %455 = vmatpush1.bf16.msra.mxu0 0
          %456 = vmatprep.subr.bf16.mxu0 0
          %457 = vmatpush1.bf16.msra.mxu0 0
          %458 = vmatprep.subr.bf16.mxu0 0
          %459 = vmatpush1.bf16.msra.mxu0 0
          %460 = vmatprep.subr.bf16.mxu0 0
          %461 = vmatpush1.bf16.msra.mxu0 0
          %462 = vmatprep.subr.bf16.mxu0 0
          %463 = vmatpush1.bf16.msra.mxu0 0
          %464 = vmatprep.subr.bf16.mxu0 0
          %465 = vmatpush1.bf16.msra.mxu0 0
          %466 = vmatprep.subr.bf16.mxu0 0
          %467 = vmatpush1.bf16.msra.mxu0 0
          %468 = vmatprep.subr.bf16.mxu0 0
          %469 = vmatpush1.bf16.msra.mxu0 0
          %470 = vmatprep.subr.bf16.mxu0 0
          %471 = vmatpush1.bf16.msra.mxu0 0
          %472 = vmatprep.subr.bf16.mxu0 0
          %473 = vmatpush1.bf16.msra.mxu0 0
          %474 = vmatprep.subr.bf16.mxu0 0
          %475 = vmatpush1.bf16.msra.mxu0 0
          %476 = vmatprep.subr.bf16.mxu0 0
          %477 = vmatpush1.bf16.msra.mxu0 0
          %478 = vmatprep.subr.bf16.mxu0 0
          %479 = vmatpush1.bf16.msra.mxu0 0
          %480 = vmatprep.subr.bf16.mxu0 0
          %481 = vmatpush1.bf16.msra.mxu0 0
          %482 = vmatprep.subr.bf16.mxu0 0
          %483 = vmatpush1.bf16.msra.mxu0 0
          %484 = vmatprep.mubr.bf16.mxu0 0
          %485 = vmatmul.mubr.bf16.gmra.mrb[0].mxu0 %v406
          %v486 = vpop.f32.mrb[0].mxu0
          %v487 = vadd.f32 %v400, %v486
          %v488 = vpop.f32.mrb[0].mxu0
          %v489 = vpop.f32.mrb[0].mxu0
          %v490 = vpop.f32.mrb[0].mxu0
          %491 = vdwg.mxu0
          %492 = vrot.lane.b32.xlu0 %v294, 127
          %v493 = vpop.permute.xlu0 %492
          %494 = vrot.lane.b32.xlu0 %v295, 127
          %v495 = vpop.permute.xlu0 %494
          %vm496 = vcmask 515072
          %v498 = vsel %vm496, %v493, 0
          %v500 = vsel %vm496, %v495, 0
          %v502 = vsel %vm314, %v301, 0
          %v504 = vsel %vm318, %v498, 0
          %506 = vmatprep.subr.bf16.mxu0 0
          %507 = vmatpush1.bf16.msra.mxu0 %v504
          %508 = vmatprep.subr.bf16.mxu0 0
          %509 = vmatpush1.bf16.msra.mxu0 0
          %510 = vmatprep.subr.bf16.mxu0 0
          %511 = vmatpush1.bf16.msra.mxu0 0
          %512 = vmatprep.subr.bf16.mxu0 0
          %513 = vmatpush1.bf16.msra.mxu0 0
          %514 = vmatprep.subr.bf16.mxu0 0
          %515 = vmatpush1.bf16.msra.mxu0 0
          %516 = vmatprep.subr.bf16.mxu0 0
          %517 = vmatpush1.bf16.msra.mxu0 0
          %518 = vmatprep.subr.bf16.mxu0 0
          %519 = vmatpush1.bf16.msra.mxu0 0
          %520 = vmatprep.subr.bf16.mxu0 0
          %521 = vmatpush1.bf16.msra.mxu0 0
          %522 = vmatprep.subr.bf16.mxu0 0
          %523 = vmatpush1.bf16.msra.mxu0 0
          %524 = vmatprep.subr.bf16.mxu0 0
          %525 = vmatpush1.bf16.msra.mxu0 0
          %526 = vmatprep.subr.bf16.mxu0 0
          %527 = vmatpush1.bf16.msra.mxu0 0
          %528 = vmatprep.subr.bf16.mxu0 0
          %529 = vmatpush1.bf16.msra.mxu0 0
          %530 = vmatprep.subr.bf16.mxu0 0
          %531 = vmatpush1.bf16.msra.mxu0 0
          %532 = vmatprep.subr.bf16.mxu0 0
          %533 = vmatpush1.bf16.msra.mxu0 0
          %534 = vmatprep.subr.bf16.mxu0 0
          %535 = vmatpush1.bf16.msra.mxu0 0
          %536 = vmatprep.subr.bf16.mxu0 0
          %537 = vmatpush1.bf16.msra.mxu0 0
          %538 = vmatprep.mubr.bf16.mxu0 0
          %539 = vmatmul.mubr.bf16.gmra.mrb[0].mxu0 %v502
          %v540 = vpop.f32.mrb[0].mxu0
          %v541 = vadd.f32 0.0, %v540
          %v542 = vpop.f32.mrb[0].mxu0
          %v543 = vpop.f32.mrb[0].mxu0
          %v544 = vpop.f32.mrb[0].mxu0
          %545 = vdwg.mxu0
          %v546 = vsel %vm318, %v500, 0
          %548 = vmatprep.subr.bf16.mxu0 0
          %549 = vmatpush1.bf16.msra.mxu0 %v546
          %550 = vmatprep.subr.bf16.mxu0 0
          %551 = vmatpush1.bf16.msra.mxu0 0
          %552 = vmatprep.subr.bf16.mxu0 0
          %553 = vmatpush1.bf16.msra.mxu0 0
          %554 = vmatprep.subr.bf16.mxu0 0
          %555 = vmatpush1.bf16.msra.mxu0 0
          %556 = vmatprep.subr.bf16.mxu0 0
          %557 = vmatpush1.bf16.msra.mxu0 0
          %558 = vmatprep.subr.bf16.mxu0 0
          %559 = vmatpush1.bf16.msra.mxu0 0
          %560 = vmatprep.subr.bf16.mxu0 0
          %561 = vmatpush1.bf16.msra.mxu0 0
          %562 = vmatprep.subr.bf16.mxu0 0
          %563 = vmatpush1.bf16.msra.mxu0 0
          %564 = vmatprep.subr.bf16.mxu0 0
          %565 = vmatpush1.bf16.msra.mxu0 0
          %566 = vmatprep.subr.bf16.mxu0 0
          %567 = vmatpush1.bf16.msra.mxu0 0
          %568 = vmatprep.subr.bf16.mxu0 0
          %569 = vmatpush1.bf16.msra.mxu0 0
          %570 = vmatprep.subr.bf16.mxu0 0
          %571 = vmatpush1.bf16.msra.mxu0 0
          %572 = vmatprep.subr.bf16.mxu0 0
          %573 = vmatpush1.bf16.msra.mxu0 0
          %574 = vmatprep.subr.bf16.mxu0 0
          %575 = vmatpush1.bf16.msra.mxu0 0
          %576 = vmatprep.subr.bf16.mxu0 0
          %577 = vmatpush1.bf16.msra.mxu0 0
          %578 = vmatprep.subr.bf16.mxu0 0
          %579 = vmatpush1.bf16.msra.mxu0 0
          %580 = vmatprep.mubr.bf16.mxu0 0
          %581 = vmatmul.mubr.bf16.gmra.mrb[0].mxu0 %v502
          %v582 = vpop.f32.mrb[0].mxu0
          %v583 = vadd.f32 0.0, %v582
          %v584 = vpop.f32.mrb[0].mxu0
          %v585 = vpop.f32.mrb[0].mxu0
          %v586 = vpop.f32.mrb[0].mxu0
          %587 = vdwg.mxu0
          %v588 = vadd.f32 %v445, %v541
          %v589 = vadd.f32 %v487, %v583
          %s590 = smul.u32 %s20, 8
          %s591 = scalar_lea.vmem %s2, %s590
          %v592 = vld [vmem:[%s591] sm:$0xff]
          %594 = vset.pattern.permute.xlu0 0
          %595 = vperm.xlu0 %594, %v592
          %v596 = vpop.permute.xlu0 %595
          %v598 = vadd.f32 %v588, %v596
          %v599 = vadd.f32 %v589, %v596
          %v600 = vmax.f32 %v598, 0.0
          %v601 = vmax.f32 %v599, 0.0
          %vm602 = vcmask 523264
          %v603 = vsel %vm602, %v600, 0.0
          %v604 = vsel %vm602, %v601, 0.0
          %v605 = vadd.f32 %v603, %v604
          %v606 = vsel %vm602, %v605, 0.0
          %607 = vadd.xlane.f32.xlu0 %v606
          %v608 = vpop.xlane.xlu0 %607
          %v609 = vmul.f32 %v608, 0.0078125
          %v610 = vsub.f32 %v600, %v609
          %v611 = vsub.f32 %v601, %v609
          %v612 = vmul.f32 %v610, %v610
          %v613 = vmul.f32 %v611, %v611
          %v614 = vsel %vm602, %v612, 0.0
          %v615 = vsel %vm602, %v613, 0.0
          %v616 = vadd.f32 %v614, %v615
          %v617 = vsel %vm602, %v616, 0.0
          %618 = vadd.xlane.f32.xlu0 %v617
          %v619 = vpop.xlane.xlu0 %618
          %v620 = vmul.f32 %v619, 0.0078125
          %s621 = scalar_lea.vmem %s3, %s590
          %v622 = vld [vmem:[%s621] sm:$0xff]
          %s623 = scalar_lea.vmem %s4, %s590
          %v624 = vld [vmem:[%s623] sm:$0xff]
          %v625 = vadd.f32 %v620, 1e-05
          %v626 = vrsqrt.pop %v625
          %v627 = vmul.f32 %v626, %v622
          %629 = vset.pattern.permute.xlu0 0
          %630 = vperm.xlu0 %629, %v627
          %v631 = vpop.permute.xlu0 %630
          %v633 = vmul.f32 %v610, %v631
          %v634 = vmul.f32 %v611, %v631
          %636 = vset.pattern.permute.xlu0 0
          %637 = vperm.xlu0 %636, %v624
          %v638 = vpop.permute.xlu0 %637
          %v640 = vadd.f32 %v633, %v638
          %v641 = vadd.f32 %v634, %v638
          %642 = vst.msk [vmem:[#allocation2] sm:$0xff] %vm602, %v640
          %643 = vst.msk [vmem:[#allocation2 + $0x8] sm:$0xff] %vm602, %v641
          %644 = vst.msk [vmem:[%s275] sm:$0xff] %vm602, %v640
          %645 = vst.msk [vmem:[%s275 + $0x8] sm:$0xff] %vm602, %v641
        $region90: #{tpu_custom_call.1} parent=73 // pred_fallthru
          _
        %p646 = scmp.eq.s32.totalorder %s20, 3
        // Predicated region
        $region91: #{tpu_custom_call.1} parent=73 // pred_check
          %p647 = pneg %p646
        $region92: #{tpu_custom_call.1} parent=73 // pred_check_branch
          %649 = sbr.rel (%p647) target = $region94
        $region93: #{tpu_custom_call.1} parent=73 // pred_region
          %v650 = vld [vmem:[%s247] sm:$0xff]
          %v651 = vld [vmem:[%s247 + $0x8] sm:$0xff]
          %vm652 = vcmask 523264
          %653 = vst.msk [vmem:[%s275] sm:$0xff] %vm652, %v650
          %654 = vst.msk [vmem:[%s275 + $0x8] sm:$0xff] %vm652, %v651
        $region94: #{tpu_custom_call.1} parent=73 // pred_fallthru
          _
        %s655 = sand.u32 %s138, 1
        %s656 = scalar_lea.sflag [#allocation6], %s655
        %s657 = sand.u32 %s138, 1
        %s658 = smul.addr %s657, 16
        %s659 = scalar_lea.vmem [#allocation7], %s658
        // Predicated region
        $region95: #{tpu_custom_call.1} parent=73 // pred_check
          %p660 = pneg %p148
        $region96: #{tpu_custom_call.1} parent=73 // pred_check_branch
          %662 = sbr.rel (%p660) target = $region98
        $region97: #{tpu_custom_call.1} parent=73 // pred_region
          %s664 = ssub.s32 256, 256
          %665 = vsyncadd %s656, %s664
          %s666 = smul.addr %s20, 128
          %s667 = scalar_lea.hbm %s5, %s666
          %s668 = sshll.u32 %s659, 4
          %s669 = int_to_ptr.vmem [resolvable:$true] %s668
          %674 = dma.vmem_to_hbm [thread:$0]  %s669, 256, %s667, %s656, 128, 512, 8
        $region98: #{tpu_custom_call.1} parent=73 // pred_fallthru
          _
      $region74: #{tpu_custom_call.1} parent=5 // pred_fallthru
        _
      %p675 = scmp.le.s32.totalorder 2, %s15
      // Predicated region
      $region99: #{tpu_custom_call.1} parent=5 // pred_check
        %p676 = pneg %p675
      $region100: #{tpu_custom_call.1} parent=5 // pred_check_branch
        %678 = sbr.rel (%p676) target = $region102
      $region101: #{tpu_custom_call.1} parent=5 // pred_region
        %s679 = ssub.s32 %s15, 2
        // Predicated region
        $region103: #{tpu_custom_call.1} parent=101 // pred_check
          %p680 = pneg %p154
        $region104: #{tpu_custom_call.1} parent=101 // pred_check_branch
          %682 = sbr.rel (%p680) target = $region106
        $region105: #{tpu_custom_call.1} parent=101 // pred_region
          %s683 = sand.u32 %s139, 1
          %s684 = scalar_lea.sflag [#allocation6], %s683
          %s685 = sand.u32 %s139, 1
          %s686 = smul.addr %s685, 16
          %s687 = scalar_lea.vmem [#allocation7], %s686
          %688 = dma.done %s684, 256
        $region106: #{tpu_custom_call.1} parent=101 // pred_fallthru
          _
      $region102: #{tpu_custom_call.1} parent=5 // pred_fallthru
        _
    $region6: #{tpu_custom_call.1} parent=1 // loop_footer
      %s19 = sadd.s32 1, %s15
    $region7: #{tpu_custom_call.1} parent=1 // loop_footer_branch
      %14 = sbr.rel target = $region3
    $region8: #{tpu_custom_call.1} parent=1 // loop_exit
      _
    %689 = vsyncpa [#allocation5], 1
    %s690 = scalar_lea.sflag [#allocation5], 1
    %691 = vsyncpa %s690, 1
    %692 = vsyncpa [#allocation6], 1
    %s693 = scalar_lea.sflag [#allocation6], 1
    %694 = vsyncpa %s693, 1

</llo_original>
